<compile_context>
chip_gen: v5e
topology: v5e:2x2
jax: 0.10.0
libtpu: 0.0.40
codegen_flags: <defaults>
</compile_context>

<pallas_src>
import functools

import jax
import jax.numpy as jnp
from jax.experimental import pallas as pl
from jax.experimental.pallas import tpu as pltpu


_SUBLANE = 8
_MAX_TILE_B = 1024                    # cap on rows per batch tile
_MAX_SINGLE_BLOCK_D = 8192            # keep whole feature axis in one block up to here
_FEATURE_TILE = 2048                  # feature tile when the reduction axis is gridded
_X_WINDOW_BYTES = 16 * 1024 * 1024    # budget for the double-buffered (tb, td) windows
_VMEM_LIMIT_BYTES = 32 * 1024 * 1024  # > v5e default 16 MiB, < v7x physical 64 MiB


def _round_up(v, m):
    return ((v + m - 1) // m) * m


# --------------------------------------------------------------------- kernels
def _energy_kernel_single(x_ref, iv_ref, w_ref, o_ref):
    """Whole feature axis in one block: single pass, no accumulator RMW."""
    xf = x_ref[...].astype(jnp.float32)          # bf16/f16 inputs upcast in VMEM
    o_ref[...] = jnp.sum(xf * (0.5 * xf * iv_ref[...] - w_ref[...]),
                         axis=-1, keepdims=True)


def _energy_kernel_tiled(x_ref, iv_ref, w_ref, o_ref):
    """Accumulates 0.5*sum(x^2*iv) - sum(x*w) across feature tiles (axis 1)."""
    k = pl.program_id(1)

    @pl.when(k == 0)
    def _init():
        o_ref[...] = jnp.zeros_like(o_ref)

    xf = x_ref[...].astype(jnp.float32)
    o_ref[...] = o_ref[...] + jnp.sum(
        xf * (0.5 * xf * iv_ref[...] - w_ref[...]), axis=-1, keepdims=True)


def _fused_kernel_single(x_ref, iv_ref, w_ref, e_ref, g_ref):
    """Fused energy + analytical gradient; x read from HBM once (single block)."""
    xf = x_ref[...].astype(jnp.float32)
    iv = iv_ref[...]
    w = w_ref[...]
    xiv = xf * iv
    e_ref[...] = jnp.sum(xf * (0.5 * xiv - w), axis=-1, keepdims=True)
    g_ref[...] = (xiv - w).astype(g_ref.dtype)   # (x - mu) / sigma^2


def _fused_kernel_tiled(x_ref, iv_ref, w_ref, e_ref, g_ref):
    """Fused energy + gradient with a gridded (arbitrary) feature reduction axis."""
    k = pl.program_id(1)

    @pl.when(k == 0)
    def _init():
        e_ref[...] = jnp.zeros_like(e_ref)

    xf = x_ref[...].astype(jnp.float32)
    iv = iv_ref[...]
    w = w_ref[...]
    xiv = xf * iv
    e_ref[...] = e_ref[...] + jnp.sum(xf * (0.5 * xiv - w), axis=-1, keepdims=True)
    g_ref[...] = (xiv - w).astype(g_ref.dtype)


# ------------------------------------------------------------ jitted wrappers
@functools.partial(jax.jit, static_argnames=("dim", "td", "nd", "tb", "nb"))
def _energy_impl(x2, iv_p, w_p, c, *, dim, td, nd, tb, nb):
    b = x2.shape[0]
    b_pad, d_pad = nb * tb, nd * td
    if (b_pad - b) or (d_pad - dim):
        x2 = jnp.pad(x2, ((0, b_pad - b), (0, d_pad - dim)))
    cparams = pltpu.CompilerParams(
        dimension_semantics=("parallel",) if nd == 1 else ("parallel", "arbitrary"),
        vmem_limit_bytes=_VMEM_LIMIT_BYTES)

    if nd == 1:
        out = pl.pallas_call(
            _energy_kernel_single,
            out_shape=jax.ShapeDtypeStruct((b_pad, 1), jnp.float32),
            grid_spec=pltpu.PrefetchScalarGridSpec(
                num_scalar_prefetch=0,
                grid=(nb,),
                in_specs=[
                    pl.BlockSpec((tb, td), lambda i: (i, 0)),   # x tile
                    pl.BlockSpec((1, td), lambda i: (0, 0)),    # 1/sigma^2
                    pl.BlockSpec((1, td), lambda i: (0, 0)),    # mu/sigma^2
                ],
                out_specs=pl.BlockSpec((tb, 1), lambda i: (i, 0)),
            ),
            compiler_params=cparams,
        )(x2, iv_p, w_p)
    else:
        out = pl.pallas_call(
            _energy_kernel_tiled,
            out_shape=jax.ShapeDtypeStruct((b_pad, 1), jnp.float32),
            grid_spec=pltpu.PrefetchScalarGridSpec(
                num_scalar_prefetch=0,
                grid=(nb, nd),                                   # reduction axis last
                in_specs=[
                    pl.BlockSpec((tb, td), lambda i, k: (i, k)),
                    pl.BlockSpec((1, td), lambda i, k: (0, k)),
                    pl.BlockSpec((1, td), lambda i, k: (0, k)),
                ],
                # Same output block across k => resident accumulator.
                out_specs=pl.BlockSpec((tb, 1), lambda i, k: (i, 0)),
            ),
            compiler_params=cparams,
        )(x2, iv_p, w_p)
    # NOTE: with tb >= 8 rows the (tb, 1) writeback is a negligible fraction of
    # the x read, so the narrow masked store is amortized; a lane-dense (1, tb)
    # slab would need an in-kernel sublane->lane relayout and is not worth it.
    return out[:b, 0] + c                                        # (batch,) float32


@functools.partial(jax.jit, static_argnames=("dim", "td", "nd", "tb", "nb"))
def _fused_impl(x2, iv_p, w_p, c, *, dim, td, nd, tb, nb):
    b = x2.shape[0]
    b_pad, d_pad = nb * tb, nd * td
    if (b_pad - b) or (d_pad - dim):
        x2 = jnp.pad(x2, ((0, b_pad - b), (0, d_pad - dim)))
    g_dtype = x2.dtype
    cparams = pltpu.CompilerParams(
        dimension_semantics=("parallel",) if nd == 1 else ("parallel", "arbitrary"),
        vmem_limit_bytes=_VMEM_LIMIT_BYTES)
    out_shape = (jax.ShapeDtypeStruct((b_pad, 1), jnp.float32),
                 jax.ShapeDtypeStruct((b_pad, d_pad), g_dtype))

    if nd == 1:
        energy, grad = pl.pallas_call(
            _fused_kernel_single,
            out_shape=out_shape,
            grid_spec=pltpu.PrefetchScalarGridSpec(
                num_scalar_prefetch=0,
                grid=(nb,),
                in_specs=[
                    pl.BlockSpec((tb, td), lambda i: (i, 0)),
                    pl.BlockSpec((1, td), lambda i: (0, 0)),
                    pl.BlockSpec((1, td), lambda i: (0, 0)),
                ],
                out_specs=[
                    pl.BlockSpec((tb, 1), lambda i: (i, 0)),
                    pl.BlockSpec((tb, td), lambda i: (i, 0)),
                ],
            ),
            compiler_params=cparams,
        )(x2, iv_p, w_p)
    else:
        energy, grad = pl.pallas_call(
            _fused_kernel_tiled,
            out_shape=out_shape,
            grid_spec=pltpu.PrefetchScalarGridSpec(
                num_scalar_prefetch=0,
                grid=(nb, nd),
                in_specs=[
                    pl.BlockSpec((tb, td), lambda i, k: (i, k)),
                    pl.BlockSpec((1, td), lambda i, k: (0, k)),
                    pl.BlockSpec((1, td), lambda i, k: (0, k)),
                ],
                out_specs=[
                    pl.BlockSpec((tb, 1), lambda i, k: (i, 0)),   # resident acc
                    pl.BlockSpec((tb, td), lambda i, k: (i, k)),  # per-tile grad
                ],
            ),
            compiler_params=cparams,
        )(x2, iv_p, w_p)
    return energy[:b, 0] + c, grad[:b, :dim]


class GaussianEnergyPallas:
    """Concrete BaseEnergyFunction (diagonal-Gaussian potential) with a Pallas forward.

    Mirrors the PyTorch contract:
      - __call__ resolves the compute dtype (float32); narrow float inputs are
        DMA'd as-is and upcast inside the kernel,
      - forward returns shape (batch,), float32,
      - gradient() is analytical (grad E = (x - mu) / sigma^2); the fused
        energy_and_gradient() reads x from HBM only once.
    """

    # TODO(synk): torch device movement (.to) / torch.cuda.amp autocast plumbing
    # from the base class has no Pallas equivalent; accumulation is always float32.

    def __init__(self, dim: int, dtype=jnp.float32):
        self.dtype = dtype
        self.dim = dim

        # Feature tiling: one block if D is modest, otherwise grid the reduction
        # axis ("arbitrary") so tiles stay inside VMEM even on v7x (64 MiB/TC).
        self.td = dim if dim <= _MAX_SINGLE_BLOCK_D else _FEATURE_TILE
        self.nd = pl.cdiv(dim, self.td)
        self.d_pad = self.nd * self.td

        # Deterministic parameter init (synthetic; shapes implied by forward).
        d = jnp.arange(dim, dtype=jnp.float32)
        self.mu = (0.01 * d).reshape(1, dim)                     # (1, D)
        sigma = 1.0 + 0.5 * jnp.sin(d)                           # (D,)
        self.inv_var = (1.0 / (sigma * sigma)).reshape(1, dim)   # (1, D)

        # Precomputed kernel operands: w = mu/sigma^2 and c = 0.5*sum(mu^2/sigma^2),
        # so E = 0.5*sum(x^2*iv) - sum(x*w) + c.  Zero-padded iv/w columns
        # contribute exactly 0 energy and 0 gradient.
        pad_d = self.d_pad - dim
        self._iv_p = jnp.pad(self.inv_var, ((0, 0), (0, pad_d)))
        self._w_p = jnp.pad(self.mu * self.inv_var, ((0, 0), (0, pad_d)))
        self._c = float(0.5 * jnp.sum(self.mu * self.mu * self.inv_var))

    # ------------------------------------------------------------------ tiling
    def _batch_tile(self, batch: int, itemsize: int) -> int:
        # Sub-32-bit inputs need a sublane multiple of 32 // itemsize.
        align = max(_SUBLANE, 32 // itemsize)
        # Fit the double-buffered (tb, td) x window plus a fused-gradient output
        # window in the budget (conservative f32 accounting: 2*2 bufs * 4 B = 16 B/elem).
        tb = _X_WINDOW_BYTES // (16 * self.td)
        tb = max(align, min(_MAX_TILE_B, tb))
        tb -= tb % align
        tb = max(tb, align)
        b_al = _round_up(batch, align)
        if b_al <= tb:
            # Small batch: split into (up to) two tiles so both v7x TensorCores
            # get a grid step under "parallel".
            tb = max(align, _round_up(pl.cdiv(b_al, 2), align))
        return tb

    def _canon(self, x):
        b = x.shape[0]
        x2 = x.reshape(b, -1)
        if x2.shape[1] != self.dim:
            raise ValueError(f"expected {self.dim} features, got {x2.shape[1]}")
        if not jnp.issubdtype(x2.dtype, jnp.floating):
            x2 = x2.astype(self.dtype)
        tb = self._batch_tile(b, x2.dtype.itemsize)
        nb = pl.cdiv(b, tb)
        return x2, tb, nb

    # ----------------------------------------------------------------- forward
    def forward(self, x: jnp.ndarray) -> jnp.ndarray:
        x2, tb, nb = self._canon(x)
        return _energy_impl(x2, self._iv_p, self._w_p, self._c,
                            dim=self.dim, td=self.td, nd=self.nd, tb=tb, nb=nb)

    def energy_and_gradient(self, x: jnp.ndarray):
        x2, tb, nb = self._canon(x)
        energy, grad = _fused_impl(x2, self._iv_p, self._w_p, self._c,
                                   dim=self.dim, td=self.td, nd=self.nd,
                                   tb=tb, nb=nb)
        return energy, grad.reshape(x.shape)

    def gradient(self, x: jnp.ndarray) -> jnp.ndarray:
        # Analytical gradient (same shape/dtype as x).  When the energy is
        # needed too, prefer energy_and_gradient() (single pass over x).
        orig_dtype = x.dtype
        x32 = x.reshape(x.shape[0], -1).astype(jnp.float32)
        g = (x32 - self.mu) * self.inv_var
        return g.reshape(x.shape).astype(orig_dtype)

    def __call__(self, x: jnp.ndarray) -> jnp.ndarray:
        # PyTorch casts to self.dtype here; we defer the upcast of narrow floats
        # (bf16/f16) into the kernel to halve the HBM read of x.
        if not jnp.issubdtype(x.dtype, jnp.floating):
            x = x.astype(self.dtype)
        return self.forward(x)


if __name__ == "__main__":
    key = jax.random.PRNGKey(0)
    batch, dim = 16, 128
    x = jax.random.normal(key, (batch, dim), dtype=jnp.float32)

    fn = GaussianEnergyPallas(dim=dim)

    # Forward (float32 path).
    energy = jax.block_until_ready(fn(x))
    ref = 0.5 * jnp.sum((x - fn.mu) ** 2 * fn.inv_var, axis=-1)
    assert energy.shape == (batch,)
    assert jnp.allclose(energy, ref, rtol=1e-4, atol=1e-4)

    # Same energies for a (batch, 2, 64) view of the input (arbitrary *dims).
    energy3 = jax.block_until_ready(fn(x.reshape(batch, 2, 64)))
    assert jnp.allclose(energy3, ref, rtol=1e-4, atol=1e-4)

    # Fused energy + analytical gradient (single pass over x).
    e2, g = jax.block_until_ready(fn.energy_and_gradient(x))
    gref = (x - fn.mu) * fn.inv_var
    assert g.shape == x.shape
    assert jnp.allclose(e2, ref, rtol=1e-4, atol=1e-4)
    assert jnp.allclose(g, gref, rtol=1e-4, atol=1e-4)

    # bf16 input path: DMA'd as bf16, upcast to f32 inside the kernel.
    x_bf = x.astype(jnp.bfloat16)
    e_bf = jax.block_until_ready(fn(x_bf))
    ref_bf = 0.5 * jnp.sum((x_bf.astype(jnp.float32) - fn.mu) ** 2 * fn.inv_var, axis=-1)
    assert jnp.allclose(e_bf, ref_bf, rtol=1e-3, atol=1e-3)

    print("KERNEL_OK")
</pallas_src>

<mosaic_0001>
module attributes {stable_mosaic.version = 11 : i64} {
  func.func @_energy_kernel_single(%arg0: i32, %arg1: memref<8x128xf32, #tpu.memory_space<vmem>>, %arg2: memref<1x128xf32, #tpu.memory_space<vmem>>, %arg3: memref<1x128xf32, #tpu.memory_space<vmem>>, %arg4: memref<8x1xf32, #tpu.memory_space<vmem>>) attributes {dimension_semantics = [#tpu.dimension_semantics<parallel>], iteration_bounds = array<i64: 2>, scalar_prefetch = 0 : i64, scratch_operands = 0 : i64, tpu.core_type = #tpu.core_type<tc>, window_params = [{transform_indices = @transform_0, window_bounds = array<i64: 8, 128>}, {pipeline_mode = #tpu.pipeline_mode<synchronous>, transform_indices = @transform_1, window_bounds = array<i64: 1, 128>}, {pipeline_mode = #tpu.pipeline_mode<synchronous>, transform_indices = @transform_2, window_bounds = array<i64: 1, 128>}, {transform_indices = @transform_3, window_bounds = array<i64: 8, 1>}]} {
    %c0 = arith.constant 0 : index
    %c0_0 = arith.constant 0 : index
    %0 = vector.load %arg1[%c0, %c0_0] : memref<8x128xf32, #tpu.memory_space<vmem>>, vector<8x128xf32>
    %cst = arith.constant 5.000000e-01 : f32
    %1 = vector.broadcast %cst : f32 to vector<8x128xf32>
    %2 = arith.mulf %1, %0 : vector<8x128xf32>
    %c0_1 = arith.constant 0 : index
    %c0_2 = arith.constant 0 : index
    %3 = vector.load %arg2[%c0_1, %c0_2] : memref<1x128xf32, #tpu.memory_space<vmem>>, vector<1x128xf32>
    %4 = vector.broadcast %3 : vector<1x128xf32> to vector<8x128xf32>
    %5 = arith.mulf %2, %4 : vector<8x128xf32>
    %c0_3 = arith.constant 0 : index
    %c0_4 = arith.constant 0 : index
    %6 = vector.load %arg3[%c0_3, %c0_4] : memref<1x128xf32, #tpu.memory_space<vmem>>, vector<1x128xf32>
    %7 = vector.broadcast %6 : vector<1x128xf32> to vector<8x128xf32>
    %8 = arith.subf %5, %7 : vector<8x128xf32>
    %9 = arith.mulf %0, %8 : vector<8x128xf32>
    %cst_5 = arith.constant dense<0.000000e+00> : vector<8xf32>
    %10 = vector.multi_reduction <add>, %9, %cst_5 [1] : vector<8x128xf32> to vector<8xf32>
    %11 = vector.shape_cast %10 : vector<8xf32> to vector<8x1xf32>
    %c0_6 = arith.constant 0 : index
    %c0_7 = arith.constant 0 : index
    %12 = vector.load %arg4[%c0_6, %c0_7] : memref<8x1xf32, #tpu.memory_space<vmem>>, vector<8x1xf32>
    tpu.vector_store %arg4[%c0_6, %c0_7], %11 {strides = array<i32>} : memref<8x1xf32, #tpu.memory_space<vmem>>, vector<8x1xf32>,
    return
  }
  func.func @transform_0(%arg0: i32) -> (i32, i32) {
    %c0_i32 = arith.constant 0 : i32
    %c0_i32_0 = arith.constant 0 : i32
    return %arg0, %c0_i32 : i32, i32
  }
  func.func @transform_1(%arg0: i32) -> (i32, i32) {
    %c0_i32 = arith.constant 0 : i32
    %c0_i32_0 = arith.constant 0 : i32
    %c0_i32_1 = arith.constant 0 : i32
    return %c0_i32, %c0_i32_0 : i32, i32
  }
  func.func @transform_2(%arg0: i32) -> (i32, i32) {
    %c0_i32 = arith.constant 0 : i32
    %c0_i32_0 = arith.constant 0 : i32
    %c0_i32_1 = arith.constant 0 : i32
    return %c0_i32, %c0_i32_0 : i32, i32
  }
  func.func @transform_3(%arg0: i32) -> (i32, i32) {
    %c0_i32 = arith.constant 0 : i32
    %c0_i32_0 = arith.constant 0 : i32
    return %arg0, %c0_i32 : i32, i32
  }
}

</mosaic_0001>

<llo_original>
// kernel: _energy_impl.1
$region0: #{_energy_impl.1}
  #allocation0 [shape = 'u32[]', space=smem, size = 0x4, offset = 0x4, fixed_abs, tag = 'smem constant byte address 0x4 - core index']
  #allocation1 [shape = 'u32[72,128]{1,0:T(1,128)}', space=vmem, size = 0x9000, scoped, tag = 'internal scratch']
  %s0 = inlined_call_operand.hbm [shape: f32[16,128], index: 0, kind: input, shape index: {}]
  %s1 = inlined_call_operand.vmem [shape: f32[1,128], index: 1, kind: input, shape index: {}]
  %s2 = inlined_call_operand.vmem [shape: f32[1,128], index: 2, kind: input, shape index: {}]
  %s3 = inlined_call_operand.vmem [shape: f32[16,1], index: 3, kind: output, shape index: {}]
  %s4 = sld [smem:[#allocation0]]
  $region49: #{_energy_impl.1} parent=0
    _
  %s6 = ssub.s32 1, %s4
  %s7 = scalar_select 0, %s6, %s4
  $region1: #{_energy_impl.1} parent=0
    #allocation2 [shape = 'u8[8192]{0}', space=vmem, size = 0x2000, scoped, tag = 'input window, operand 0']
    #allocation3 [shape = 's32[2]{0}', space=sflag, size = 0x8, scoped, tag = 'scoped memory for _energy_impl.1']
    %8 = vsyncpa [#allocation3], 0
    %s9 = scalar_lea.sflag [#allocation3], 1
    %10 = vsyncpa %s9, 0
    loop: start=0, step=1, limit=4
    $region2: #{_energy_impl.1} parent=1 // loop_pre_header
      _
    $region3: #{_energy_impl.1} parent=1 // loop_header
      %s12 = sphi 0, %s16
      %p13 = scmp.ge.s32.totalorder %s12, 4
      %s22 = sphi 0, %s24
      %s25 = sphi 0, %s22
      %s26 = sphi 0, %s25
      %s42 = sphi 0, %s26
      %s46 = sphi 0, %s46
      %s48 = sphi 0, %s46
      %s49 = sphi 0, %s48
      %s63 = sphi 0, %s49
      %s67 = sphi 0, %s67
      %s69 = sphi 0, %s67
      %s70 = sphi 0, %s69
      %s84 = sphi 0, %s70
      %s90 = sphi 0, %s92
      %s93 = sphi 0, %s90
      %s94 = sphi 0, %s93
      %s110 = sphi 0, %s94
    $region4: #{_energy_impl.1} parent=1 // loop_header_branch
      %15 = sbr.rel (%p13) target = $region8
    $region5: #{_energy_impl.1} parent=1 // loop_body
      %s17 = ssub.s32 %s12, 1
      %s18 = ssub.s32 %s12, 2
      %s19 = sadd.s32 %s12, 1
      %s20 = ssub.s32 %s12, %s19
      %p21 = scmp.eq.s32.totalorder %s20, 0
      %s23 = sadd.s32 %s22, 1
      %s24 = scalar_select %p21, %s22, %s23
      %p27 = pneg %p21
      %p28 = scmp.eq.s32.totalorder %s12, 1
      %p29 = por %p27, %p28
      %p30 = scmp.ne.s32.totalorder %s22, %s25
      %p31 = scmp.eq.s32.totalorder %s12, 0
      %p32 = por %p30, %p31
      %p33 = scmp.ne.s32.totalorder %s22, %s25
      %p34 = scmp.eq.s32.totalorder %s17, 1
      %p35 = por %p33, %p34
      %p36 = scmp.ne.s32.totalorder %s25, %s26
      %p37 = scmp.eq.s32.totalorder %s17, 0
      %p38 = por %p36, %p37
      %p39 = scmp.ne.s32.totalorder %s25, %s26
      %p40 = scmp.eq.s32.totalorder %s18, 1
      %p41 = por %p39, %p40
      %p43 = scmp.ne.s32.totalorder %s26, %s42
      %p44 = scmp.eq.s32.totalorder %s18, 0
      %p45 = por %p43, %p44
      %s47 = sadd.s32 %s46, 1
      %p50 = scmp.eq.s32.totalorder %s12, 1
      %p51 = scmp.ne.s32.totalorder %s46, %s48
      %p52 = scmp.eq.s32.totalorder %s12, 0
      %p53 = por %p51, %p52
      %p54 = scmp.ne.s32.totalorder %s46, %s48
      %p55 = scmp.eq.s32.totalorder %s17, 1
      %p56 = por %p54, %p55
      %p57 = scmp.ne.s32.totalorder %s48, %s49
      %p58 = scmp.eq.s32.totalorder %s17, 0
      %p59 = por %p57, %p58
      %p60 = scmp.ne.s32.totalorder %s48, %s49
      %p61 = scmp.eq.s32.totalorder %s18, 1
      %p62 = por %p60, %p61
      %p64 = scmp.ne.s32.totalorder %s49, %s63
      %p65 = scmp.eq.s32.totalorder %s18, 0
      %p66 = por %p64, %p65
      %s68 = sadd.s32 %s67, 1
      %p71 = scmp.eq.s32.totalorder %s12, 1
      %p72 = scmp.ne.s32.totalorder %s67, %s69
      %p73 = scmp.eq.s32.totalorder %s12, 0
      %p74 = por %p72, %p73
      %p75 = scmp.ne.s32.totalorder %s67, %s69
      %p76 = scmp.eq.s32.totalorder %s17, 1
      %p77 = por %p75, %p76
      %p78 = scmp.ne.s32.totalorder %s69, %s70
      %p79 = scmp.eq.s32.totalorder %s17, 0
      %p80 = por %p78, %p79
      %p81 = scmp.ne.s32.totalorder %s69, %s70
      %p82 = scmp.eq.s32.totalorder %s18, 1
      %p83 = por %p81, %p82
      %p85 = scmp.ne.s32.totalorder %s70, %s84
      %p86 = scmp.eq.s32.totalorder %s18, 0
      %p87 = por %p85, %p86
      %s88 = ssub.s32 %s12, %s19
      %p89 = scmp.eq.s32.totalorder %s88, 0
      %s91 = sadd.s32 %s90, 1
      %s92 = scalar_select %p89, %s90, %s91
      %p95 = pneg %p89
      %p96 = scmp.eq.s32.totalorder %s12, 1
      %p97 = por %p95, %p96
      %p98 = scmp.ne.s32.totalorder %s90, %s93
      %p99 = scmp.eq.s32.totalorder %s12, 0
      %p100 = por %p98, %p99
      %p101 = scmp.ne.s32.totalorder %s90, %s93
      %p102 = scmp.eq.s32.totalorder %s17, 1
      %p103 = por %p101, %p102
      %p104 = scmp.ne.s32.totalorder %s93, %s94
      %p105 = scmp.eq.s32.totalorder %s17, 0
      %p106 = por %p104, %p105
      %p107 = scmp.ne.s32.totalorder %s93, %s94
      %p108 = scmp.eq.s32.totalorder %s18, 1
      %p109 = por %p107, %p108
      %p111 = scmp.ne.s32.totalorder %s94, %s110
      %p112 = scmp.eq.s32.totalorder %s18, 0
      %p113 = por %p111, %p112
      %p114 = scmp.le.s32.totalorder 1, %s12
      %p115 = scmp.lt.s32.totalorder %s12, 3
      %p116 = pnand %p114, %p115
      %p117 = pneg %p116
      // Predicated region
      $region9: #{_energy_impl.1} parent=5 // pred_check
        _
      $region10: #{_energy_impl.1} parent=5 // pred_check_branch
        %119 = sbr.rel (%p116) target = $region12
      $region11: #{_energy_impl.1} parent=5 // pred_region
        %s120 = ssub.s32 %s12, 1
        // Predicated region
        $region13: #{_energy_impl.1} parent=11 // pred_check
          %p121 = pneg %p59
        $region14: #{_energy_impl.1} parent=11 // pred_check_branch
          %123 = sbr.rel (%p121) target = $region16
        $region15: #{_energy_impl.1} parent=11 // pred_region
          _
        $region16: #{_energy_impl.1} parent=11 // pred_fallthru
          _
        // Predicated region
        $region17: #{_energy_impl.1} parent=11 // pred_check
          %p124 = pneg %p80
        $region18: #{_energy_impl.1} parent=11 // pred_check_branch
          %126 = sbr.rel (%p124) target = $region20
        $region19: #{_energy_impl.1} parent=11 // pred_region
          _
        $region20: #{_energy_impl.1} parent=11 // pred_fallthru
          _
      $region12: #{_energy_impl.1} parent=5 // pred_fallthru
        _
      %p127 = scmp.lt.s32.totalorder %s12, 2
      // Predicated region
      $region21: #{_energy_impl.1} parent=5 // pred_check
        %p128 = pneg %p127
      $region22: #{_energy_impl.1} parent=5 // pred_check_branch
        %130 = sbr.rel (%p128) target = $region24
      $region23: #{_energy_impl.1} parent=5 // pred_region
        // Predicated region
        $region25: #{_energy_impl.1} parent=23 // pred_check
          %p131 = pneg %p32
        $region26: #{_energy_impl.1} parent=23 // pred_check_branch
          %133 = sbr.rel (%p131) target = $region28
        $region27: #{_energy_impl.1} parent=23 // pred_region
          %s134 = sand.u32 %s22, 1
          %s135 = scalar_lea.sflag [#allocation3], %s134
          %s136 = sand.u32 %s22, 1
          %s137 = smul.addr %s136, 8
          %s138 = scalar_lea.vmem [#allocation2], %s137
          %140 = vsyncadd %s135, 0
          %s141 = smul.addr %s12, 8
          %s142 = scalar_lea.hbm %s0, %s141
          %s144 = sshll.u32 %s142, 4
          %s145 = int_to_ptr.hbm [resolvable:$true] %s144
          %s146 = sshll.u32 %s138, 4
          %s147 = int_to_ptr.vmem [resolvable:$true] %s146
          %149 = dma.hbm_to_vmem [thread:$0]  %s145, 128, %s147, %s135
        $region28: #{_energy_impl.1} parent=23 // pred_fallthru
          _
      $region24: #{_energy_impl.1} parent=5 // pred_fallthru
        _
      %p150 = scmp.le.s32.totalorder 1, %s12
      %p151 = scmp.lt.s32.totalorder %s12, 3
      %p152 = pnand %p150, %p151
      %p153 = pneg %p152
      // Predicated region
      $region29: #{_energy_impl.1} parent=5 // pred_check
        _
      $region30: #{_energy_impl.1} parent=5 // pred_check_branch
        %155 = sbr.rel (%p152) target = $region32
      $region31: #{_energy_impl.1} parent=5 // pred_region
        %s156 = ssub.s32 %s12, 1
        %s157 = sand.u32 %s25, 1
        %s158 = scalar_lea.sflag [#allocation3], %s157
        %s159 = sand.u32 %s25, 1
        %s160 = smul.addr %s159, 8
        %s161 = scalar_lea.vmem [#allocation2], %s160
        // Predicated region
        $region33: #{_energy_impl.1} parent=31 // pred_check
          %p162 = pneg %p38
        $region34: #{_energy_impl.1} parent=31 // pred_check_branch
          %164 = sbr.rel (%p162) target = $region36
        $region35: #{_energy_impl.1} parent=31 // pred_region
          %166 = dma.done %s158, 128
        $region36: #{_energy_impl.1} parent=31 // pred_fallthru
          _
        %s167 = sand.u32 %s25, 1
        %s168 = scalar_lea.sflag [#allocation3], %s167
        %s169 = sand.u32 %s25, 1
        %s170 = smul.addr %s169, 8
        %s171 = scalar_lea.vmem [#allocation2], %s170
        %p172 = pneg %p38
        %p173 = pneg %p35
        %p174 = pneg %p59
        %p175 = pneg %p56
        %p176 = pneg %p80
        %p177 = pneg %p77
        %p178 = pneg %p106
        %p179 = pneg %p103
        %p180 = scmp.lt.s32.totalorder %s17, 1
        %s181 = scalar_select %p180, %s17, 1
        %s182 = smul.addr %s181, 8
        %s183 = scalar_lea.vmem %s3, %s182
        %p184 = scmp.lt.s32.totalorder %s17, 1
        %s185 = scalar_select %p184, %s17, 1
        %s186 = smul.addr %s185, 8
        %s187 = scalar_lea.vmem %s3, %s186
        %v188 = vld [vmem:[%s161] sm:$0xff]
        %v189 = vmul.f32 %v188, 0.5
        %v190 = vld [vmem:[%s1] sm:$0x1]
        %v192 = vperm.slane %v190, 0
        %v194 = vmul.f32 %v189, %v192
        %v195 = vld [vmem:[%s2] sm:$0x1]
        %v197 = vperm.slane %v195, 0
        %v199 = vsub.f32 %v194, %v197
        %v200 = vmul.f32 %v188, %v199
        %201 = vadd.xlane.f32.xlu0 %v200
        %v202 = vpop.xlane.xlu0 %201
        %vm203 = vcmask 7168
        %204 = vst.msk [vmem:[%s187] sm:$0xff] %vm203, %v202
        %p205 = scmp.lt.s32.totalorder %s17, 1
        %s206 = scalar_select %p205, %s17, 1
        %s207 = smul.addr %s206, 8
        %s208 = scalar_lea.vmem %s3, %s207
        // Predicated region
        $region37: #{_energy_impl.1} parent=31 // pred_check
          %p209 = pneg %p103
        $region38: #{_energy_impl.1} parent=31 // pred_check_branch
          %211 = sbr.rel (%p209) target = $region40
        $region39: #{_energy_impl.1} parent=31 // pred_region
          _
        $region40: #{_energy_impl.1} parent=31 // pred_fallthru
          _
      $region32: #{_energy_impl.1} parent=5 // pred_fallthru
        _
      %p212 = scmp.le.s32.totalorder 2, %s12
      // Predicated region
      $region41: #{_energy_impl.1} parent=5 // pred_check
        %p213 = pneg %p212
      $region42: #{_energy_impl.1} parent=5 // pred_check_branch
        %215 = sbr.rel (%p213) target = $region44
      $region43: #{_energy_impl.1} parent=5 // pred_region
        %s216 = ssub.s32 %s12, 2
        // Predicated region
        $region45: #{_energy_impl.1} parent=43 // pred_check
          %p217 = pneg %p109
        $region46: #{_energy_impl.1} parent=43 // pred_check_branch
          %219 = sbr.rel (%p217) target = $region48
        $region47: #{_energy_impl.1} parent=43 // pred_region
          %p220 = scmp.lt.s32.totalorder %s18, 1
          %s221 = scalar_select %p220, %s18, 1
          %s222 = smul.addr %s221, 8
          %s223 = scalar_lea.vmem %s3, %s222
        $region48: #{_energy_impl.1} parent=43 // pred_fallthru
          _
      $region44: #{_energy_impl.1} parent=5 // pred_fallthru
        _
    $region6: #{_energy_impl.1} parent=1 // loop_footer
      %s16 = sadd.s32 1, %s12
    $region7: #{_energy_impl.1} parent=1 // loop_footer_branch
      %11 = sbr.rel target = $region3
    $region8: #{_energy_impl.1} parent=1 // loop_exit
      _
    %224 = vsyncpa [#allocation3], 1
    %s225 = scalar_lea.sflag [#allocation3], 1
    %226 = vsyncpa %s225, 1

</llo_original>
